<compile_context>
chip_gen: v7x
topology: tpu7x:2x2x1
jax: 0.10.0
libtpu: 0.0.40
codegen_flags: <defaults>
</compile_context>

<pallas_src>
import jax
import jax.numpy as jnp
import numpy as np
from jax import lax
from jax.experimental import pallas as pl
from jax.experimental.pallas import tpu as pltpu


def _round_up(v, m):
    return -(-v // m) * m


def _stacking_fcn_kernel(p_ref, w1t_ref, shift_ref, w2t_ref, b2_ref, o_ref):
    """One (batch, spatial-tile) per grid step; spatial dim is lane-dense.

    p_ref    : (1, Kp, T)  bf16 im2col patches (K = 9*C_in zero-padded to Kp)
    w1t_ref  : (Fp, Kp)    bf16 3x3 conv weights with BN scale folded in
    shift_ref: (Fp, 1)     f32 folded conv-bias + BN shift
    w2t_ref  : (Cp, Fp)    bf16 1x1 conv weights (num_classes padded to Cp)
    b2_ref   : (Cp, 1)     f32 1x1 conv bias (zero-padded)
    o_ref    : (1, Cp, T)  f32 output tile
    """
    # 3x3 conv (im2col) as one MXU matmul, f32 accumulate.
    h = jnp.dot(w1t_ref[...], p_ref[0], preferred_element_type=jnp.float32)
    # Folded BN + bias shift and ReLU in f32 (single VPU pass).
    h = jnp.maximum(h + shift_ref[...], 0.0)
    # 1x1 conv == dense layer over channels.
    out = jnp.dot(w2t_ref[...], h.astype(jnp.bfloat16),
                  preferred_element_type=jnp.float32) + b2_ref[...]
    o_ref[0] = out.astype(o_ref.dtype)


@jax.jit
def stacking_fcn_forward(x_nchw, w1, b1, gamma, beta, run_mean, run_var,
                         w2, b2, eps=1e-5):
    """x_nchw: (N, C_in, H, W).  Returns (N, num_classes, H, W) (NCHW)."""
    x = x_nchw.astype(jnp.float32)          # module does x.float()
    N, C, H, W = x.shape
    Fn = w1.shape[0]                        # filter_nr
    NC = w2.shape[0]                        # num_classes
    HW = H * W
    K = 9 * C                               # im2col contraction size

    Kp = _round_up(K, 16)                   # bf16 sublane tile
    Fp = _round_up(Fn, 8)
    Cp = _round_up(NC, 8)
    T = min(2048, _round_up(HW, 128))       # spatial (lane) tile
    HWp = _round_up(HW, T)
    n_t = HWp // T

    # ---- im2col slab, channels-in-sublanes / spatial-in-lanes, bf16 --------
    # K-axis order is (dy, dx, c); zero K-pad is fused into the concatenate.
    x_pad = jnp.pad(x.astype(jnp.bfloat16), ((0, 0), (0, 0), (1, 1), (1, 1)))
    taps = [x_pad[:, :, dy:dy + H, dx:dx + W].reshape(N, C, HW)
            for dy in range(3) for dx in range(3)]
    if Kp > K:
        taps.append(jnp.zeros((N, Kp - K, HW), jnp.bfloat16))
    patches = jnp.concatenate(taps, axis=1)                 # (N, Kp, HW)
    if HWp > HW:
        patches = jnp.pad(patches, ((0, 0), (0, 0), (0, HWp - HW)))

    # ---- fold conv bias + eval-mode BatchNorm into weights / one shift -----
    scale = (gamma / jnp.sqrt(run_var + eps)).astype(jnp.float32)
    shift = ((b1 - run_mean) * scale + beta).astype(jnp.float32)

    # PyTorch conv weight (F, C, 3, 3) -> (F, 3, 3, C) -> (F, 9*C); K order
    # matches the (dy, dx, c) tap order above.  BN scale folded per row.
    w1t = jnp.transpose(w1.astype(jnp.float32), (0, 2, 3, 1)).reshape(Fn, K)
    w1t = w1t * scale[:, None]
    w1t_p = jnp.pad(w1t, ((0, Fp - Fn), (0, Kp - K))).astype(jnp.bfloat16)
    shift_p = jnp.pad(shift, (0, Fp - Fn)).reshape(Fp, 1)

    # (NC, F, 1, 1) -> (NC, F), zero-padded on both dims.
    w2t = w2[:, :, 0, 0].astype(jnp.float32)
    w2t_p = jnp.pad(w2t, ((0, Cp - NC), (0, Fp - Fn))).astype(jnp.bfloat16)
    b2_p = jnp.pad(b2.astype(jnp.float32), (0, Cp - NC)).reshape(Cp, 1)

    # ---- VMEM budget (double-buffered tiles + resident weights) ------------
    tile_vmem = 2 * (Kp * T * 2 + Cp * T * 4)
    weight_vmem = Fp * Kp * 2 + Cp * Fp * 2 + (Fp + Cp) * 4
    vmem_limit = int(min(48 * 2**20, max(8 * 2**20, 4 * (tile_vmem + weight_vmem))))

    out = pl.pallas_call(
        _stacking_fcn_kernel,
        out_shape=jax.ShapeDtypeStruct((N, Cp, HWp), jnp.float32),
        grid_spec=pltpu.PrefetchScalarGridSpec(
            num_scalar_prefetch=0,
            grid=(N, n_t),
            in_specs=[
                pl.BlockSpec((1, Kp, T), lambda b, t: (b, 0, t)),
                pl.BlockSpec((Fp, Kp), lambda b, t: (0, 0)),
                pl.BlockSpec((Fp, 1), lambda b, t: (0, 0)),
                pl.BlockSpec((Cp, Fp), lambda b, t: (0, 0)),
                pl.BlockSpec((Cp, 1), lambda b, t: (0, 0)),
            ],
            out_specs=pl.BlockSpec((1, Cp, T), lambda b, t: (b, 0, t)),
        ),
        compiler_params=pltpu.CompilerParams(
            dimension_semantics=("parallel", "parallel"),
            vmem_limit_bytes=vmem_limit),
    )(patches, w1t_p, shift_p, w2t_p, b2_p)

    # Drop the small padded channel/spatial columns; return NCHW like PyTorch.
    return out[:, :NC, :HW].reshape(N, NC, H, W)


def _reference_forward(x_nchw, w1, b1, gamma, beta, run_mean, run_var,
                       w2, b2, eps=1e-5):
    """Pure-JAX f32 reference (mirrors the PyTorch module in eval mode, NCHW)."""
    x = x_nchw.astype(jnp.float32)
    y = lax.conv_general_dilated(
        x, w1.astype(jnp.float32), window_strides=(1, 1),
        padding=((1, 1), (1, 1)), dimension_numbers=("NCHW", "OIHW", "NCHW"))
    y = y + b1[None, :, None, None]
    y = (y - run_mean[None, :, None, None]) / jnp.sqrt(
        run_var[None, :, None, None] + eps)
    y = y * gamma[None, :, None, None] + beta[None, :, None, None]
    y = jnp.maximum(y, 0.0)
    z = lax.conv_general_dilated(
        y, w2.astype(jnp.float32), window_strides=(1, 1), padding="VALID",
        dimension_numbers=("NCHW", "OIHW", "NCHW"))
    return z + b2[None, :, None, None]


if __name__ == "__main__":
    # Small shapes consistent with the module (input_model_nr=4).
    N, C_in, H, W = 2, 4, 16, 16
    filter_nr, num_classes = 32, 3

    key = jax.random.PRNGKey(0)
    ks = jax.random.split(key, 8)

    x = jax.random.normal(ks[0], (N, C_in, H, W), jnp.float32)

    # Deterministic synthetic parameters (shapes per nn.Conv2d / nn.BatchNorm2d).
    w1 = jax.random.normal(ks[1], (filter_nr, C_in, 3, 3), jnp.float32) * 0.1
    b1 = jax.random.normal(ks[2], (filter_nr,), jnp.float32) * 0.1
    gamma = 1.0 + 0.1 * jax.random.normal(ks[3], (filter_nr,), jnp.float32)
    beta = 0.1 * jax.random.normal(ks[4], (filter_nr,), jnp.float32)
    run_mean = 0.1 * jax.random.normal(ks[5], (filter_nr,), jnp.float32)
    run_var = jnp.abs(1.0 + 0.1 * jax.random.normal(ks[6], (filter_nr,), jnp.float32))
    w2 = jax.random.normal(ks[7], (num_classes, filter_nr, 1, 1), jnp.float32) * 0.1
    b2 = jnp.linspace(-0.1, 0.1, num_classes, dtype=jnp.float32)

    out = stacking_fcn_forward(x, w1, b1, gamma, beta, run_mean, run_var, w2, b2)
    out = jax.block_until_ready(out)

    ref = jax.block_until_ready(
        _reference_forward(x, w1, b1, gamma, beta, run_mean, run_var, w2, b2))

    # bf16 MXU operands (f32 accumulate) -> loosened tolerance per review.
    np.testing.assert_allclose(np.asarray(out), np.asarray(ref),
                               rtol=3e-2, atol=3e-2)
    print("KERNEL_OK")
</pallas_src>

<mosaic_0001>
module attributes {stable_mosaic.version = 11 : i64} {
  func.func @_stacking_fcn_kernel(%arg0: i32, %arg1: i32, %arg2: memref<1x48x256xbf16, #tpu.memory_space<vmem>>, %arg3: memref<32x48xbf16, #tpu.memory_space<vmem>>, %arg4: memref<32x1xf32, #tpu.memory_space<vmem>>, %arg5: memref<8x32xbf16, #tpu.memory_space<vmem>>, %arg6: memref<8x1xf32, #tpu.memory_space<vmem>>, %arg7: memref<1x8x256xf32, #tpu.memory_space<vmem>>) attributes {dimension_semantics = [#tpu.dimension_semantics<parallel>, #tpu.dimension_semantics<parallel>], iteration_bounds = array<i64: 2, 1>, scalar_prefetch = 0 : i64, scratch_operands = 0 : i64, tpu.core_type = #tpu.core_type<tc>, window_params = [{transform_indices = @transform_0, window_bounds = array<i64: 1, 48, 256>}, {pipeline_mode = #tpu.pipeline_mode<synchronous>, transform_indices = @transform_1, window_bounds = array<i64: 32, 48>}, {pipeline_mode = #tpu.pipeline_mode<synchronous>, transform_indices = @transform_2, window_bounds = array<i64: 32, 1>}, {pipeline_mode = #tpu.pipeline_mode<synchronous>, transform_indices = @transform_3, window_bounds = array<i64: 8, 32>}, {pipeline_mode = #tpu.pipeline_mode<synchronous>, transform_indices = @transform_4, window_bounds = array<i64: 8, 1>}, {transform_indices = @transform_5, window_bounds = array<i64: 1, 8, 256>}]} {
    %c0 = arith.constant 0 : index
    %c0_0 = arith.constant 0 : index
    %0 = vector.load %arg3[%c0, %c0_0] : memref<32x48xbf16, #tpu.memory_space<vmem>>, vector<32x48xbf16>
    %c0_1 = arith.constant 0 : index
    %c0_2 = arith.constant 0 : index
    %c0_3 = arith.constant 0 : index
    %1 = vector.load %arg2[%c0_1, %c0_2, %c0_3] : memref<1x48x256xbf16, #tpu.memory_space<vmem>>, vector<1x48x256xbf16>
    %2 = vector.shape_cast %1 : vector<1x48x256xbf16> to vector<48x256xbf16>
    %cst = arith.constant dense<0.000000e+00> : vector<32x256xf32>
    %3 = tpu.matmul %0, %2, %cst {dimension_numbers = #tpu.dot_dimension_numbers<[1], [0], [0], [1], [0, 0, 1, 1], [], []>} : vector<32x48xbf16>, vector<48x256xbf16>, vector<32x256xf32> -> vector<32x256xf32>
    %c0_4 = arith.constant 0 : index
    %c0_5 = arith.constant 0 : index
    %4 = vector.load %arg4[%c0_4, %c0_5] : memref<32x1xf32, #tpu.memory_space<vmem>>, vector<32x1xf32>
    %5 = vector.broadcast %4 : vector<32x1xf32> to vector<32x256xf32>
    %6 = arith.addf %3, %5 : vector<32x256xf32>
    %cst_6 = arith.constant 0.000000e+00 : f32
    %7 = vector.broadcast %cst_6 : f32 to vector<32x256xf32>
    %8 = arith.maximumf %6, %7 : vector<32x256xf32>
    %c0_7 = arith.constant 0 : index
    %c0_8 = arith.constant 0 : index
    %9 = vector.load %arg5[%c0_7, %c0_8] : memref<8x32xbf16, #tpu.memory_space<vmem>>, vector<8x32xbf16>
    %10 = arith.truncf %8 : vector<32x256xf32> to vector<32x256xbf16>
    %cst_9 = arith.constant dense<0.000000e+00> : vector<8x256xf32>
    %11 = tpu.matmul %9, %10, %cst_9 {dimension_numbers = #tpu.dot_dimension_numbers<[1], [0], [0], [1], [0, 0, 1, 1], [], []>} : vector<8x32xbf16>, vector<32x256xbf16>, vector<8x256xf32> -> vector<8x256xf32>
    %c0_10 = arith.constant 0 : index
    %c0_11 = arith.constant 0 : index
    %12 = vector.load %arg6[%c0_10, %c0_11] : memref<8x1xf32, #tpu.memory_space<vmem>>, vector<8x1xf32>
    %13 = vector.broadcast %12 : vector<8x1xf32> to vector<8x256xf32>
    %14 = arith.addf %11, %13 : vector<8x256xf32>
    %c0_12 = arith.constant 0 : index
    %c0_13 = arith.constant 0 : index
    %c0_14 = arith.constant 0 : index
    %15 = vector.load %arg7[%c0_12, %c0_13, %c0_14] : memref<1x8x256xf32, #tpu.memory_space<vmem>>, vector<1x8x256xf32>
    %16 = vector.shape_cast %15 : vector<1x8x256xf32> to vector<8x256xf32>
    %17 = vector.shape_cast %14 : vector<8x256xf32> to vector<1x8x256xf32>
    tpu.vector_store %arg7[%c0_12, %c0_13, %c0_14], %17 {strides = array<i32>} : memref<1x8x256xf32, #tpu.memory_space<vmem>>, vector<1x8x256xf32>,
    return
  }
  func.func @transform_0(%arg0: i32, %arg1: i32) -> (i32, i32, i32) {
    %c0_i32 = arith.constant 0 : i32
    %c0_i32_0 = arith.constant 0 : i32
    return %arg0, %c0_i32, %arg1 : i32, i32, i32
  }
  func.func @transform_1(%arg0: i32, %arg1: i32) -> (i32, i32) {
    %c0_i32 = arith.constant 0 : i32
    %c0_i32_0 = arith.constant 0 : i32
    %c0_i32_1 = arith.constant 0 : i32
    return %c0_i32, %c0_i32_0 : i32, i32
  }
  func.func @transform_2(%arg0: i32, %arg1: i32) -> (i32, i32) {
    %c0_i32 = arith.constant 0 : i32
    %c0_i32_0 = arith.constant 0 : i32
    %c0_i32_1 = arith.constant 0 : i32
    return %c0_i32, %c0_i32_0 : i32, i32
  }
  func.func @transform_3(%arg0: i32, %arg1: i32) -> (i32, i32) {
    %c0_i32 = arith.constant 0 : i32
    %c0_i32_0 = arith.constant 0 : i32
    %c0_i32_1 = arith.constant 0 : i32
    return %c0_i32, %c0_i32_0 : i32, i32
  }
  func.func @transform_4(%arg0: i32, %arg1: i32) -> (i32, i32) {
    %c0_i32 = arith.constant 0 : i32
    %c0_i32_0 = arith.constant 0 : i32
    %c0_i32_1 = arith.constant 0 : i32
    return %c0_i32, %c0_i32_0 : i32, i32
  }
  func.func @transform_5(%arg0: i32, %arg1: i32) -> (i32, i32, i32) {
    %c0_i32 = arith.constant 0 : i32
    %c0_i32_0 = arith.constant 0 : i32
    return %arg0, %c0_i32, %arg1 : i32, i32, i32
  }
}

</mosaic_0001>

<llo_original>
// kernel: stacking_fcn_forward.1
$region0: #{stacking_fcn_forward.1}
  #allocation0 [shape = 'u32[]', space=smem, size = 0x4, offset = 0x4, fixed_abs, tag = 'smem constant byte address 0x4 - core index']
  #allocation1 [shape = 'u32[144,128]{1,0:T(1,128)}', space=vmem, size = 0x12000, scoped, tag = 'internal scratch']
  %s0 = inlined_call_operand.vmem [shape: bf16[2,48,256], index: 0, kind: input, shape index: {}]
  %s1 = inlined_call_operand.vmem [shape: bf16[32,48], index: 1, kind: input, shape index: {}]
  %s2 = inlined_call_operand.vmem [shape: f32[32,1], index: 2, kind: input, shape index: {}]
  %s3 = inlined_call_operand.vmem [shape: bf16[8,32], index: 3, kind: input, shape index: {}]
  %s4 = inlined_call_operand.vmem [shape: f32[8,1], index: 4, kind: input, shape index: {}]
  %s5 = inlined_call_operand.vmem [shape: f32[2,8,256], index: 5, kind: output, shape index: {}]
  %s6 = sld [smem:[#allocation0]]
  $region53: #{stacking_fcn_forward.1} parent=0
    _
  %s8 = ssub.s32 1, %s6
  %s9 = scalar_select 0, %s8, %s6
  loop: start=0, step=1, limit=4
  $region2: #{stacking_fcn_forward.1} parent=0 // loop_pre_header
    _
  $region3: #{stacking_fcn_forward.1} parent=0 // loop_header
    %s11 = sphi 0, %s15
    %p12 = scmp.ge.s32.totalorder %s11, 4
    %s18 = sphi 0, %s30
    %s19 = sphi 0, %s26
    %s20 = sphi 0, %s18
    %s21 = sphi 0, %s19
    %s22 = sphi 0, %s20
    %s23 = sphi 0, %s21
    %s35 = sphi 0, %s37
    %s38 = sphi 0, %s35
    %s39 = sphi 0, %s38
    %s55 = sphi 0, %s39
    %s59 = sphi 0, %s59
    %s61 = sphi 0, %s59
    %s62 = sphi 0, %s61
    %s76 = sphi 0, %s62
    %s80 = sphi 0, %s80
    %s82 = sphi 0, %s80
    %s83 = sphi 0, %s82
    %s97 = sphi 0, %s83
    %s101 = sphi 0, %s101
    %s103 = sphi 0, %s101
    %s104 = sphi 0, %s103
    %s118 = sphi 0, %s104
    %s122 = sphi 0, %s122
    %s124 = sphi 0, %s122
    %s125 = sphi 0, %s124
    %s139 = sphi 0, %s125
    %s147 = sphi 0, %s149
    %s150 = sphi 0, %s147
    %s151 = sphi 0, %s150
    %s167 = sphi 0, %s151
  $region4: #{stacking_fcn_forward.1} parent=0 // loop_header_branch
    %14 = sbr.rel (%p12) target = $region8
  $region5: #{stacking_fcn_forward.1} parent=0 // loop_body
    %s16 = ssub.s32 %s11, 1
    %s17 = ssub.s32 %s11, 2
    %s24 = sadd.s32 1, %s19
    %p25 = scmp.ge.s32.totalorder %s24, 1
    %s26 = scalar_select %p25, 0, %s24
    %s27 = sadd.s32 1, %s18
    %s28 = scalar_select %p25, %s27, %s18
    %p29 = scmp.ge.s32.totalorder %s28, 2
    %s30 = scalar_select %p29, 0, %s28
    %s31 = ssub.s32 %s18, %s30
    %s32 = ssub.s32 %s19, %s26
    %s33 = sor.u32 %s31, %s32
    %p34 = scmp.eq.s32.totalorder %s33, 0
    %s36 = sadd.s32 %s35, 1
    %s37 = scalar_select %p34, %s35, %s36
    %p40 = pneg %p34
    %p41 = scmp.eq.s32.totalorder %s11, 1
    %p42 = por %p40, %p41
    %p43 = scmp.ne.s32.totalorder %s35, %s38
    %p44 = scmp.eq.s32.totalorder %s11, 0
    %p45 = por %p43, %p44
    %p46 = scmp.ne.s32.totalorder %s35, %s38
    %p47 = scmp.eq.s32.totalorder %s16, 1
    %p48 = por %p46, %p47
    %p49 = scmp.ne.s32.totalorder %s38, %s39
    %p50 = scmp.eq.s32.totalorder %s16, 0
    %p51 = por %p49, %p50
    %p52 = scmp.ne.s32.totalorder %s38, %s39
    %p53 = scmp.eq.s32.totalorder %s17, 1
    %p54 = por %p52, %p53
    %p56 = scmp.ne.s32.totalorder %s39, %s55
    %p57 = scmp.eq.s32.totalorder %s17, 0
    %p58 = por %p56, %p57
    %s60 = sadd.s32 %s59, 1
    %p63 = scmp.eq.s32.totalorder %s11, 1
    %p64 = scmp.ne.s32.totalorder %s59, %s61
    %p65 = scmp.eq.s32.totalorder %s11, 0
    %p66 = por %p64, %p65
    %p67 = scmp.ne.s32.totalorder %s59, %s61
    %p68 = scmp.eq.s32.totalorder %s16, 1
    %p69 = por %p67, %p68
    %p70 = scmp.ne.s32.totalorder %s61, %s62
    %p71 = scmp.eq.s32.totalorder %s16, 0
    %p72 = por %p70, %p71
    %p73 = scmp.ne.s32.totalorder %s61, %s62
    %p74 = scmp.eq.s32.totalorder %s17, 1
    %p75 = por %p73, %p74
    %p77 = scmp.ne.s32.totalorder %s62, %s76
    %p78 = scmp.eq.s32.totalorder %s17, 0
    %p79 = por %p77, %p78
    %s81 = sadd.s32 %s80, 1
    %p84 = scmp.eq.s32.totalorder %s11, 1
    %p85 = scmp.ne.s32.totalorder %s80, %s82
    %p86 = scmp.eq.s32.totalorder %s11, 0
    %p87 = por %p85, %p86
    %p88 = scmp.ne.s32.totalorder %s80, %s82
    %p89 = scmp.eq.s32.totalorder %s16, 1
    %p90 = por %p88, %p89
    %p91 = scmp.ne.s32.totalorder %s82, %s83
    %p92 = scmp.eq.s32.totalorder %s16, 0
    %p93 = por %p91, %p92
    %p94 = scmp.ne.s32.totalorder %s82, %s83
    %p95 = scmp.eq.s32.totalorder %s17, 1
    %p96 = por %p94, %p95
    %p98 = scmp.ne.s32.totalorder %s83, %s97
    %p99 = scmp.eq.s32.totalorder %s17, 0
    %p100 = por %p98, %p99
    %s102 = sadd.s32 %s101, 1
    %p105 = scmp.eq.s32.totalorder %s11, 1
    %p106 = scmp.ne.s32.totalorder %s101, %s103
    %p107 = scmp.eq.s32.totalorder %s11, 0
    %p108 = por %p106, %p107
    %p109 = scmp.ne.s32.totalorder %s101, %s103
    %p110 = scmp.eq.s32.totalorder %s16, 1
    %p111 = por %p109, %p110
    %p112 = scmp.ne.s32.totalorder %s103, %s104
    %p113 = scmp.eq.s32.totalorder %s16, 0
    %p114 = por %p112, %p113
    %p115 = scmp.ne.s32.totalorder %s103, %s104
    %p116 = scmp.eq.s32.totalorder %s17, 1
    %p117 = por %p115, %p116
    %p119 = scmp.ne.s32.totalorder %s104, %s118
    %p120 = scmp.eq.s32.totalorder %s17, 0
    %p121 = por %p119, %p120
    %s123 = sadd.s32 %s122, 1
    %p126 = scmp.eq.s32.totalorder %s11, 1
    %p127 = scmp.ne.s32.totalorder %s122, %s124
    %p128 = scmp.eq.s32.totalorder %s11, 0
    %p129 = por %p127, %p128
    %p130 = scmp.ne.s32.totalorder %s122, %s124
    %p131 = scmp.eq.s32.totalorder %s16, 1
    %p132 = por %p130, %p131
    %p133 = scmp.ne.s32.totalorder %s124, %s125
    %p134 = scmp.eq.s32.totalorder %s16, 0
    %p135 = por %p133, %p134
    %p136 = scmp.ne.s32.totalorder %s124, %s125
    %p137 = scmp.eq.s32.totalorder %s17, 1
    %p138 = por %p136, %p137
    %p140 = scmp.ne.s32.totalorder %s125, %s139
    %p141 = scmp.eq.s32.totalorder %s17, 0
    %p142 = por %p140, %p141
    %s143 = ssub.s32 %s18, %s30
    %s144 = ssub.s32 %s19, %s26
    %s145 = sor.u32 %s143, %s144
    %p146 = scmp.eq.s32.totalorder %s145, 0
    %s148 = sadd.s32 %s147, 1
    %s149 = scalar_select %p146, %s147, %s148
    %p152 = pneg %p146
    %p153 = scmp.eq.s32.totalorder %s11, 1
    %p154 = por %p152, %p153
    %p155 = scmp.ne.s32.totalorder %s147, %s150
    %p156 = scmp.eq.s32.totalorder %s11, 0
    %p157 = por %p155, %p156
    %p158 = scmp.ne.s32.totalorder %s147, %s150
    %p159 = scmp.eq.s32.totalorder %s16, 1
    %p160 = por %p158, %p159
    %p161 = scmp.ne.s32.totalorder %s150, %s151
    %p162 = scmp.eq.s32.totalorder %s16, 0
    %p163 = por %p161, %p162
    %p164 = scmp.ne.s32.totalorder %s150, %s151
    %p165 = scmp.eq.s32.totalorder %s17, 1
    %p166 = por %p164, %p165
    %p168 = scmp.ne.s32.totalorder %s151, %s167
    %p169 = scmp.eq.s32.totalorder %s17, 0
    %p170 = por %p168, %p169
    %p171 = scmp.le.s32.totalorder 1, %s11
    %p172 = scmp.lt.s32.totalorder %s11, 3
    %p173 = pnand %p171, %p172
    %p174 = pneg %p173
    // Predicated region
    $region9: #{stacking_fcn_forward.1} parent=5 // pred_check
      _
    $region10: #{stacking_fcn_forward.1} parent=5 // pred_check_branch
      %176 = sbr.rel (%p173) target = $region12
    $region11: #{stacking_fcn_forward.1} parent=5 // pred_region
      %s177 = ssub.s32 %s11, 1
      // Predicated region
      $region13: #{stacking_fcn_forward.1} parent=11 // pred_check
        %p178 = pneg %p72
      $region14: #{stacking_fcn_forward.1} parent=11 // pred_check_branch
        %180 = sbr.rel (%p178) target = $region16
      $region15: #{stacking_fcn_forward.1} parent=11 // pred_region
        _
      $region16: #{stacking_fcn_forward.1} parent=11 // pred_fallthru
        _
      // Predicated region
      $region17: #{stacking_fcn_forward.1} parent=11 // pred_check
        %p181 = pneg %p93
      $region18: #{stacking_fcn_forward.1} parent=11 // pred_check_branch
        %183 = sbr.rel (%p181) target = $region20
      $region19: #{stacking_fcn_forward.1} parent=11 // pred_region
        _
      $region20: #{stacking_fcn_forward.1} parent=11 // pred_fallthru
        _
      // Predicated region
      $region21: #{stacking_fcn_forward.1} parent=11 // pred_check
        %p184 = pneg %p114
      $region22: #{stacking_fcn_forward.1} parent=11 // pred_check_branch
        %186 = sbr.rel (%p184) target = $region24
      $region23: #{stacking_fcn_forward.1} parent=11 // pred_region
        _
      $region24: #{stacking_fcn_forward.1} parent=11 // pred_fallthru
        _
      // Predicated region
      $region25: #{stacking_fcn_forward.1} parent=11 // pred_check
        %p187 = pneg %p135
      $region26: #{stacking_fcn_forward.1} parent=11 // pred_check_branch
        %189 = sbr.rel (%p187) target = $region28
      $region27: #{stacking_fcn_forward.1} parent=11 // pred_region
        _
      $region28: #{stacking_fcn_forward.1} parent=11 // pred_fallthru
        _
    $region12: #{stacking_fcn_forward.1} parent=5 // pred_fallthru
      _
    %p190 = scmp.lt.s32.totalorder %s11, 2
    // Predicated region
    $region29: #{stacking_fcn_forward.1} parent=5 // pred_check
      %p191 = pneg %p190
    $region30: #{stacking_fcn_forward.1} parent=5 // pred_check_branch
      %193 = sbr.rel (%p191) target = $region32
    $region31: #{stacking_fcn_forward.1} parent=5 // pred_region
      // Predicated region
      $region33: #{stacking_fcn_forward.1} parent=31 // pred_check
        %p194 = pneg %p45
      $region34: #{stacking_fcn_forward.1} parent=31 // pred_check_branch
        %196 = sbr.rel (%p194) target = $region36
      $region35: #{stacking_fcn_forward.1} parent=31 // pred_region
        %s197 = smul.u32 2, %s19
        %p198 = scmp.lt.s32.totalorder %s18, 1
        %s199 = scalar_select %p198, %s18, 1
        %p200 = scmp.lt.s32.totalorder %s197, 1
        %s201 = scalar_select %p200, %s197, 1
        %s202 = smul.addr %s199, 12
        %s203 = sadd.s32 %s201, %s202
        %s204 = smul.addr %s203, 4
        %s205 = scalar_lea.vmem %s0, %s204
        %s206 = smul.u32 2, %s19
      $region36: #{stacking_fcn_forward.1} parent=31 // pred_fallthru
        _
    $region32: #{stacking_fcn_forward.1} parent=5 // pred_fallthru
      _
    %p207 = scmp.le.s32.totalorder 1, %s11
    %p208 = scmp.lt.s32.totalorder %s11, 3
    %p209 = pnand %p207, %p208
    %p210 = pneg %p209
    // Predicated region
    $region37: #{stacking_fcn_forward.1} parent=5 // pred_check
      _
    $region38: #{stacking_fcn_forward.1} parent=5 // pred_check_branch
      %212 = sbr.rel (%p209) target = $region40
    $region39: #{stacking_fcn_forward.1} parent=5 // pred_region
      %s213 = ssub.s32 %s11, 1
      %s214 = smul.u32 2, %s21
      %p215 = scmp.lt.s32.totalorder %s20, 1
      %s216 = scalar_select %p215, %s20, 1
      %p217 = scmp.lt.s32.totalorder %s214, 1
      %s218 = scalar_select %p217, %s214, 1
      %s219 = smul.addr %s216, 12
      %s220 = sadd.s32 %s218, %s219
      %s221 = smul.addr %s220, 4
      %s222 = scalar_lea.vmem %s0, %s221
      %p223 = pneg %p51
      %p224 = pneg %p48
      %p225 = pneg %p72
      %p226 = pneg %p69
      %p227 = pneg %p93
      %p228 = pneg %p90
      %p229 = pneg %p114
      %p230 = pneg %p111
      %p231 = pneg %p135
      %p232 = pneg %p132
      %p233 = pneg %p163
      %p234 = pneg %p160
      %s235 = smul.u32 2, %s21
      %p236 = scmp.lt.s32.totalorder %s20, 1
      %s237 = scalar_select %p236, %s20, 1
      %p238 = scmp.lt.s32.totalorder %s235, 1
      %s239 = scalar_select %p238, %s235, 1
      %s240 = smul.addr %s237, 2
      %s241 = sadd.s32 %s239, %s240
      %s242 = smul.addr %s241, 8
      %s243 = scalar_lea.vmem %s5, %s242
      %s244 = smul.u32 2, %s21
      %p245 = scmp.lt.s32.totalorder %s20, 1
      %s246 = scalar_select %p245, %s20, 1
      %p247 = scmp.lt.s32.totalorder %s244, 1
      %s248 = scalar_select %p247, %s244, 1
      %s249 = smul.addr %s246, 12
      %s250 = sadd.s32 %s248, %s249
      %s251 = smul.addr %s250, 4
      %s252 = scalar_lea.vmem %s0, %s251
      %s253 = smul.u32 2, %s21
      %s254 = smul.u32 2, %s21
      %p255 = scmp.lt.s32.totalorder %s20, 1
      %s256 = scalar_select %p255, %s20, 1
      %p257 = scmp.lt.s32.totalorder %s254, 1
      %s258 = scalar_select %p257, %s254, 1
      %s259 = smul.addr %s256, 2
      %s260 = sadd.s32 %s258, %s259
      %s261 = smul.addr %s260, 8
      %s262 = scalar_lea.vmem %s5, %s261
      %s263 = smul.u32 2, %s21
      %v265 = vld [vmem:[%s1] sm:$0xf]
      %v266 = vld [vmem:[%s1 + $0x4] sm:$0xf]
      %v267 = vld [vmem:[%s1 + $0x8] sm:$0xf]
      %v268 = vld [vmem:[%s1 + $0xc] sm:$0xf]
      %v269 = vld [vmem:[%s252] sm:$0xff]
      %v270 = vld [vmem:[%s252 + $0x8] sm:$0xff]
      %v271 = vld [vmem:[%s252 + $0x10] sm:$0xff]
      %v272 = vld [vmem:[%s252 + $0x18] sm:$0xff]
      %v273 = vld [vmem:[%s252 + $0x20] sm:$0xff]
      %v274 = vld [vmem:[%s252 + $0x28] sm:$0xff]
      %v275 = vld [vmem:[%s2] sm:$0xff]
      %v276 = vld [vmem:[%s2 + $0x8] sm:$0xff]
      %v277 = vld [vmem:[%s2 + $0x10] sm:$0xff]
      %v278 = vld [vmem:[%s2 + $0x18] sm:$0xff]
      %280 = vset.pattern.permute.xlu0 0
      %281 = vperm.xlu0 %280, %v275
      %v282 = vpop.permute.xlu0 %281
      %285 = vset.pattern.permute.xlu0 0
      %286 = vperm.xlu0 %285, %v276
      %v287 = vpop.permute.xlu0 %286
      %290 = vset.pattern.permute.xlu0 0
      %291 = vperm.xlu0 %290, %v277
      %v292 = vpop.permute.xlu0 %291
      %295 = vset.pattern.permute.xlu0 0
      %296 = vperm.xlu0 %295, %v278
      %v297 = vpop.permute.xlu0 %296
      %v303 = vunpack.c.l.b16 %v265
      %v304 = vunpack.c.l.b16 %v266
      %v305 = vunpack.c.l.b16 %v267
      %v306 = vunpack.c.l.b16 %v268
      %v307 = vpack.c.b16 %v304, %v303
      %v308 = vpack.c.b16 %v306, %v305
      %v315 = vunpack.c.l.b16 %v269
      %v316 = vunpack.c.h.b16 %v269
      %v317 = vunpack.c.l.b16 %v270
      %v318 = vunpack.c.h.b16 %v270
      %v319 = vunpack.c.l.b16 %v271
      %v320 = vunpack.c.h.b16 %v271
      %v321 = vunpack.c.l.b16 %v272
      %v322 = vunpack.c.h.b16 %v272
      %v323 = vunpack.c.l.b16 %v273
      %v324 = vunpack.c.h.b16 %v273
      %v325 = vunpack.c.l.b16 %v274
      %v326 = vunpack.c.h.b16 %v274
      %v327 = vpack.c.b16 %v317, %v315
      %v328 = vpack.c.b16 %v318, %v316
      %v329 = vpack.c.b16 %v321, %v319
      %v330 = vpack.c.b16 %v322, %v320
      %v331 = vpack.c.b16 %v325, %v323
      %v332 = vpack.c.b16 %v326, %v324
      %vm339 = vcmask 392192
      %v341 = vsel %vm339, %v307, 0
      %v344 = vsel %vm339, %v308, 0
      %346 = vmatprep.subr.bf16.mxu0 %v328
      %347 = vmatpush1.bf16.msra.mxu0 %v327
      %348 = vmatprep.subr.bf16.mxu0 %v330
      %349 = vmatpush1.bf16.msra.mxu0 %v329
      %350 = vmatprep.subr.bf16.mxu0 %v332
      %351 = vmatpush1.bf16.msra.mxu0 %v331
      %352 = vmatprep.subr.bf16.mxu0 0
      %353 = vmatpush1.bf16.msra.mxu0 0
      %354 = vmatprep.subr.bf16.mxu0 0
      %355 = vmatpush1.bf16.msra.mxu0 0
      %356 = vmatprep.subr.bf16.mxu0 0
      %357 = vmatpush1.bf16.msra.mxu0 0
      %358 = vmatprep.subr.bf16.mxu0 0
      %359 = vmatpush1.bf16.msra.mxu0 0
      %360 = vmatprep.subr.bf16.mxu0 0
      %361 = vmatpush1.bf16.msra.mxu0 0
      %362 = vmatprep.subr.bf16.mxu0 0
      %363 = vmatpush1.bf16.msra.mxu0 0
      %364 = vmatprep.subr.bf16.mxu0 0
      %365 = vmatpush1.bf16.msra.mxu0 0
      %366 = vmatprep.subr.bf16.mxu0 0
      %367 = vmatpush1.bf16.msra.mxu0 0
      %368 = vmatprep.subr.bf16.mxu0 0
      %369 = vmatpush1.bf16.msra.mxu0 0
      %370 = vmatprep.subr.bf16.mxu0 0
      %371 = vmatpush1.bf16.msra.mxu0 0
      %372 = vmatprep.subr.bf16.mxu0 0
      %373 = vmatpush1.bf16.msra.mxu0 0
      %374 = vmatprep.subr.bf16.mxu0 0
      %375 = vmatpush1.bf16.msra.mxu0 0
      %376 = vmatprep.subr.bf16.mxu0 0
      %377 = vmatpush1.bf16.msra.mxu0 0
      %378 = vmatprep.mubr.bf16.mxu0 0
      %379 = vmatmul.mubr.bf16.gmra.mrb[0].mxu0 %v341
      %v380 = vpop.f32.mrb[0].mxu0
      %v381 = vadd.f32 %v282, %v380
      %v382 = vpop.f32.mrb[0].mxu0
      %v383 = vadd.f32 %v282, %v382
      %v384 = vpop.f32.mrb[0].mxu0
      %v385 = vadd.f32 %v287, %v384
      %v386 = vpop.f32.mrb[0].mxu0
      %v387 = vadd.f32 %v287, %v386
      %388 = vmatprep.mubr.bf16.mxu0 0
      %389 = vmatmul.mubr.bf16.gmra.mrb[0].mxu0 %v344
      %v390 = vpop.f32.mrb[0].mxu0
      %v391 = vadd.f32 %v292, %v390
      %v392 = vpop.f32.mrb[0].mxu0
      %v393 = vadd.f32 %v292, %v392
      %v394 = vpop.f32.mrb[0].mxu0
      %v395 = vadd.f32 %v297, %v394
      %v396 = vpop.f32.mrb[0].mxu0
      %v397 = vadd.f32 %v297, %v396
      %398 = vdwg.mxu0
      %v399 = vmax.f32 %v381, 0.0
      %v400 = vmax.f32 %v383, 0.0
      %v401 = vmax.f32 %v385, 0.0
      %v402 = vmax.f32 %v387, 0.0
      %v403 = vmax.f32 %v391, 0.0
      %v404 = vmax.f32 %v393, 0.0
      %v405 = vmax.f32 %v395, 0.0
      %v406 = vmax.f32 %v397, 0.0
      %v407 = vld [vmem:[%s3] sm:$0xf]
      %v408 = vpack.c.bf16 %v401, %v399
      %v409 = vpack.c.bf16 %v402, %v400
      %v410 = vpack.c.bf16 %v405, %v403
      %v411 = vpack.c.bf16 %v406, %v404
      %v412 = vld [vmem:[%s4] sm:$0xff]
      %414 = vset.pattern.permute.xlu0 0
      %415 = vperm.xlu0 %414, %v412
      %v416 = vpop.permute.xlu0 %415
      %vm418 = vcmask 261120
      %v420 = vsel %vm418, %v407, 0
      %422 = vmatprep.subr.bf16.mxu0 %v409
      %423 = vmatpush1.bf16.msra.mxu0 %v408
      %424 = vmatprep.subr.bf16.mxu0 %v411
      %425 = vmatpush1.bf16.msra.mxu0 %v410
      %426 = vmatprep.subr.bf16.mxu0 0
      %427 = vmatpush1.bf16.msra.mxu0 0
      %428 = vmatprep.subr.bf16.mxu0 0
      %429 = vmatpush1.bf16.msra.mxu0 0
      %430 = vmatprep.subr.bf16.mxu0 0
      %431 = vmatpush1.bf16.msra.mxu0 0
      %432 = vmatprep.subr.bf16.mxu0 0
      %433 = vmatpush1.bf16.msra.mxu0 0
      %434 = vmatprep.subr.bf16.mxu0 0
      %435 = vmatpush1.bf16.msra.mxu0 0
      %436 = vmatprep.subr.bf16.mxu0 0
      %437 = vmatpush1.bf16.msra.mxu0 0
      %438 = vmatprep.subr.bf16.mxu0 0
      %439 = vmatpush1.bf16.msra.mxu0 0
      %440 = vmatprep.subr.bf16.mxu0 0
      %441 = vmatpush1.bf16.msra.mxu0 0
      %442 = vmatprep.subr.bf16.mxu0 0
      %443 = vmatpush1.bf16.msra.mxu0 0
      %444 = vmatprep.subr.bf16.mxu0 0
      %445 = vmatpush1.bf16.msra.mxu0 0
      %446 = vmatprep.subr.bf16.mxu0 0
      %447 = vmatpush1.bf16.msra.mxu0 0
      %448 = vmatprep.subr.bf16.mxu0 0
      %449 = vmatpush1.bf16.msra.mxu0 0
      %450 = vmatprep.subr.bf16.mxu0 0
      %451 = vmatpush1.bf16.msra.mxu0 0
      %452 = vmatprep.subr.bf16.mxu0 0
      %453 = vmatpush1.bf16.msra.mxu0 0
      %454 = vmatprep.mubr.bf16.mxu0 0
      %455 = vmatmul.mubr.bf16.gmra.mrb[0].mxu0 %v420
      %v456 = vpop.f32.mrb[0].mxu0
      %v457 = vadd.f32 %v416, %v456
      %v458 = vpop.f32.mrb[0].mxu0
      %v459 = vadd.f32 %v416, %v458
      %v460 = vpop.f32.mrb[0].mxu0
      %v461 = vpop.f32.mrb[0].mxu0
      %462 = vdwg.mxu0
      %463 = vst [vmem:[%s262] sm:$0xff] %v457
      %464 = vst [vmem:[%s262 + $0x8] sm:$0xff] %v459
      %s465 = smul.u32 2, %s21
      %p466 = scmp.lt.s32.totalorder %s20, 1
      %s467 = scalar_select %p466, %s20, 1
      %p468 = scmp.lt.s32.totalorder %s465, 1
      %s469 = scalar_select %p468, %s465, 1
      %s470 = smul.addr %s467, 2
      %s471 = sadd.s32 %s469, %s470
      %s472 = smul.addr %s471, 8
      %s473 = scalar_lea.vmem %s5, %s472
      // Predicated region
      $region41: #{stacking_fcn_forward.1} parent=39 // pred_check
        %p474 = pneg %p160
      $region42: #{stacking_fcn_forward.1} parent=39 // pred_check_branch
        %476 = sbr.rel (%p474) target = $region44
      $region43: #{stacking_fcn_forward.1} parent=39 // pred_region
        %s477 = smul.u32 2, %s21
      $region44: #{stacking_fcn_forward.1} parent=39 // pred_fallthru
        _
    $region40: #{stacking_fcn_forward.1} parent=5 // pred_fallthru
      _
    %p478 = scmp.le.s32.totalorder 2, %s11
    // Predicated region
    $region45: #{stacking_fcn_forward.1} parent=5 // pred_check
      %p479 = pneg %p478
    $region46: #{stacking_fcn_forward.1} parent=5 // pred_check_branch
      %481 = sbr.rel (%p479) target = $region48
    $region47: #{stacking_fcn_forward.1} parent=5 // pred_region
      %s482 = ssub.s32 %s11, 2
      // Predicated region
      $region49: #{stacking_fcn_forward.1} parent=47 // pred_check
        %p483 = pneg %p166
      $region50: #{stacking_fcn_forward.1} parent=47 // pred_check_branch
        %485 = sbr.rel (%p483) target = $region52
      $region51: #{stacking_fcn_forward.1} parent=47 // pred_region
        %s486 = smul.u32 2, %s23
        %p487 = scmp.lt.s32.totalorder %s22, 1
        %s488 = scalar_select %p487, %s22, 1
        %p489 = scmp.lt.s32.totalorder %s486, 1
        %s490 = scalar_select %p489, %s486, 1
        %s491 = smul.addr %s488, 2
        %s492 = sadd.s32 %s490, %s491
        %s493 = smul.addr %s492, 8
        %s494 = scalar_lea.vmem %s5, %s493
      $region52: #{stacking_fcn_forward.1} parent=47 // pred_fallthru
        _
    $region48: #{stacking_fcn_forward.1} parent=5 // pred_fallthru
      _
  $region6: #{stacking_fcn_forward.1} parent=0 // loop_footer
    %s15 = sadd.s32 1, %s11
  $region7: #{stacking_fcn_forward.1} parent=0 // loop_footer_branch
    %10 = sbr.rel target = $region3
  $region8: #{stacking_fcn_forward.1} parent=0 // loop_exit
    _

</llo_original>
